<compile_context>
chip_gen: v7x
topology: tpu7x:2x2x1
jax: 0.10.0
libtpu: 0.0.40
codegen_flags: <defaults>
</compile_context>

<pallas_src>
import functools

import jax
import jax.numpy as jnp
from jax.experimental import pallas as pl
from jax.experimental.pallas import tpu as pltpu


_LANE = 128
_SUB = 8
_TARGET_BLOCK_BYTES = 3 << 19      # ~1.5 MiB per input block (review: 1-2 MiB)
_VMEM_IN_BUDGET_BYTES = 10 << 20   # double-buffered input blocks stay well
                                   # under v5e's 16 MiB default scoped VMEM
_VMEM_LIMIT_BYTES = 32 << 20       # explicit, <= physical on v5e/v6e/v7x
_MAX_BN = 16                       # cap on batch slabs folded per grid step
_MIN_PARALLEL_STEPS = 4            # keep >=4 parallel steps for v7x's 2 TCs
_MXU_CHANNEL_THRESHOLD = 16        # C > threshold -> MXU matmul path


def _round_up(x, m):
    return ((x + m - 1) // m) * m


def _round_down(x, m):
    return (x // m) * m


def _cdiv(a, b):
    return (a + b - 1) // b


def _conv_tiles(N, C, M, itemsize):
    """Byte-targeted lane tile + batch-fold factor for the 1x1 conv."""
    m128 = _round_up(M, _LANE)
    tm = max(_LANE, _round_down(_TARGET_BLOCK_BYTES // (C * itemsize), _LANE))
    tm = min(tm, max(_LANE,
                     _round_down(_VMEM_IN_BUDGET_BYTES // (2 * C * itemsize), _LANE)))
    tm = min(tm, m128)

    bn = 1
    if tm >= m128 and N > 1:
        per_batch = C * tm * itemsize
        bn = int(min(N, max(1, _TARGET_BLOCK_BYTES // max(per_batch, 1)), _MAX_BN))

    # Keep enough grid steps along the parallel axes (v7x: 2 TCs need work).
    while _cdiv(N, bn) * _cdiv(M, tm) < _MIN_PARALLEL_STEPS:
        if bn > 1:
            bn = max(1, bn // 2)
        elif tm > _LANE:
            tm = max(_LANE, _round_up(tm // 2, _LANE))
        else:
            break
    return bn, tm


def _upsample_row_tile(N, Ho, Wo, itemsize):
    """Output-row tile for the fused upsample+sigmoid kernel (~1 MiB blocks)."""
    ho8 = _round_up(Ho, _SUB)
    tho = max(_SUB, _round_down((1 << 20) // max(Wo * itemsize, 1), _SUB))
    tho = min(tho, ho8)
    while N * _cdiv(Ho, tho) < 2 and tho > _SUB:
        tho = max(_SUB, _round_up(tho // 2, _SUB))
    return tho


# ---------------------------------------------------------------------------
# Pallas kernels
# ---------------------------------------------------------------------------
def _conv1x1_kernel(w_ref, b_ref, x_ref, o_ref, *, use_mxu, apply_sigmoid):
    """1x1 conv (C -> 1) over a (bn, C, tm) block, optional fused sigmoid.

    w_ref: VMEM (1, C) [MXU, x dtype] or (C, 1) [VPU, f32]
    b_ref: SMEM (1,) f32      x_ref: VMEM (bn, C, tm)      o_ref: (bn, 1, tm)
    """
    bias = b_ref[0]
    for b in range(x_ref.shape[0]):          # bn is small & static (<= 16)
        xb = x_ref[b]                         # (C, tm)
        if use_mxu:
            # Native-dtype operands, f32 accumulation on the MXU.
            acc = jnp.dot(w_ref[...], xb, preferred_element_type=jnp.float32)
        else:
            # Dense whole-block multiply + channel (sublane) reduce on VPU/XLU.
            acc = jnp.sum(xb.astype(jnp.float32) * w_ref[...],
                          axis=0, keepdims=True)
        acc = acc + bias
        if apply_sigmoid:
            acc = jax.nn.sigmoid(acc)
        o_ref[b] = acc.astype(o_ref.dtype)


def _upsample_sigmoid_kernel(ah_ref, awt_ref, x_ref, o_ref):
    """Fused separable bilinear upsample (align_corners=True) + sigmoid.

    ah_ref: (tho, H) f32   awt_ref: (W, Wo) f32   x_ref: (1, H, W)
    o_ref:  (1, tho, Wo)
    """
    x = x_ref[0].astype(jnp.float32)                                    # (H, W)
    rows = jnp.dot(ah_ref[...], x, preferred_element_type=jnp.float32)  # (tho, W)
    y = jnp.dot(rows, awt_ref[...], preferred_element_type=jnp.float32) # (tho, Wo)
    o_ref[0] = jax.nn.sigmoid(y).astype(o_ref.dtype)


# ---------------------------------------------------------------------------
# Pallas wrappers
# ---------------------------------------------------------------------------
def conv1x1_pallas(x_ncm, w, b, *, apply_sigmoid):
    """1x1 conv to a single channel (+ optional fused sigmoid).

    x_ncm: (N, C, M) activations (M = H*W, lane axis).
    w: (C,) weights, b: (1,) bias.  Returns (N, 1, M) in x's dtype.
    """
    N, C, M = x_ncm.shape
    itemsize = jnp.dtype(x_ncm.dtype).itemsize
    bn, tm = _conv_tiles(N, C, M, itemsize)
    use_mxu = C > _MXU_CHANNEL_THRESHOLD

    b_arg = jnp.asarray(b, jnp.float32).reshape(1)
    bias_spec = pl.BlockSpec(memory_space=pltpu.MemorySpace.SMEM)

    if use_mxu:
        # Weights in the activation dtype so the big operand is never upcast.
        w_arg = jnp.asarray(w, x_ncm.dtype).reshape(1, C)
        w_spec = pl.BlockSpec((1, C), lambda n, i: (0, 0))      # resident
    else:
        w_arg = jnp.asarray(w, jnp.float32).reshape(C, 1)
        w_spec = pl.BlockSpec((C, 1), lambda n, i: (0, 0))      # resident

    kernel = functools.partial(_conv1x1_kernel, use_mxu=use_mxu,
                               apply_sigmoid=apply_sigmoid)

    # Ragged trailing blocks (batch and lane) are handled by Pallas:
    # OOB reads only feed OOB outputs, OOB writes are discarded -> no jnp.pad.
    grid = (_cdiv(N, bn), _cdiv(M, tm))
    return pl.pallas_call(
        kernel,
        out_shape=jax.ShapeDtypeStruct((N, 1, M), x_ncm.dtype),
        grid_spec=pltpu.PrefetchScalarGridSpec(
            num_scalar_prefetch=0,
            grid=grid,
            in_specs=[
                w_spec,
                bias_spec,
                pl.BlockSpec((bn, C, tm), lambda n, i: (n, 0, i)),
            ],
            out_specs=pl.BlockSpec((bn, 1, tm), lambda n, i: (n, 0, i)),
        ),
        compiler_params=pltpu.CompilerParams(
            dimension_semantics=("parallel", "parallel"),
            vmem_limit_bytes=_VMEM_LIMIT_BYTES),
    )(w_arg, b_arg, x_ncm)


def _interp_matrix(n_out, n_in, dtype=jnp.float32):
    """Row-stochastic bilinear interpolation matrix (align_corners=True)."""
    if n_out == 1:
        return jnp.zeros((1, n_in), dtype).at[0, 0].set(1.0)
    src = jnp.arange(n_out, dtype=jnp.float32) * (float(n_in - 1) / float(n_out - 1))
    i0 = jnp.clip(jnp.floor(src).astype(jnp.int32), 0, n_in - 1)
    i1 = jnp.minimum(i0 + 1, n_in - 1)
    f = (src - i0.astype(jnp.float32))[:, None]
    return (jax.nn.one_hot(i0, n_in, dtype=dtype) * (1.0 - f)
            + jax.nn.one_hot(i1, n_in, dtype=dtype) * f)


def upsample_sigmoid_pallas(x_nhw, scale_factor):
    """Fused bilinear (align_corners=True) upsample + sigmoid, (N,H,W)->(N,Ho,Wo)."""
    N, H, W = x_nhw.shape
    Ho, Wo = H * scale_factor, W * scale_factor
    a_h = _interp_matrix(Ho, H)           # (Ho, H)
    a_wt = _interp_matrix(Wo, W).T        # (W, Wo)

    itemsize = max(jnp.dtype(x_nhw.dtype).itemsize, 4)
    tho = _upsample_row_tile(N, Ho, Wo, itemsize)
    grid = (N, _cdiv(Ho, tho))

    # TODO(synk): for very large widths, A_w^T (W, Wo) should also be tiled
    # along Wo; kept resident here since decoder heads have modest widths.
    return pl.pallas_call(
        _upsample_sigmoid_kernel,
        out_shape=jax.ShapeDtypeStruct((N, Ho, Wo), x_nhw.dtype),
        grid_spec=pltpu.PrefetchScalarGridSpec(
            num_scalar_prefetch=0,
            grid=grid,
            in_specs=[
                pl.BlockSpec((tho, H), lambda n, i: (i, 0)),
                pl.BlockSpec((W, Wo), lambda n, i: (0, 0)),
                pl.BlockSpec((1, H, W), lambda n, i: (n, 0, 0)),
            ],
            out_specs=pl.BlockSpec((1, tho, Wo), lambda n, i: (n, i, 0)),
        ),
        compiler_params=pltpu.CompilerParams(
            dimension_semantics=("parallel", "parallel"),
            vmem_limit_bytes=_VMEM_LIMIT_BYTES),
    )(a_h, a_wt, x_nhw)


# ---------------------------------------------------------------------------
# Forward pass
# ---------------------------------------------------------------------------
def ig_forward(x_nchw, conv_w, conv_b, scale_factor=1):
    """conv_w: (1, C, 1, 1), conv_b: (1,).  Returns (N, 1, H*s, W*s)."""
    N, C, H, W = x_nchw.shape
    w = conv_w.reshape(C)
    x_ncm = x_nchw.reshape(N, C, H * W)   # NCHW batch slabs are already (C, H*W)

    if scale_factor <= 1:
        out = conv1x1_pallas(x_ncm, w, conv_b, apply_sigmoid=True)
        return out.reshape(N, 1, H, W)

    # The 1x1 conv (+ bias) commutes exactly with align_corners bilinear
    # upsampling (interp weights sum to 1):
    #   sigmoid(conv(up(x)) + b) == sigmoid(up(conv(x) + b))
    # -> conv on the small pre-upsample tensor, upsample+sigmoid fused on
    #    a single channel (one HBM pass over the large output tensor).
    pre = conv1x1_pallas(x_ncm, w, conv_b, apply_sigmoid=False).reshape(N, H, W)
    up = upsample_sigmoid_pallas(pre, scale_factor)
    return up.reshape(N, 1, H * scale_factor, W * scale_factor)


# ---------------------------------------------------------------------------
# Pure-JAX reference (exact f32, no matmuls -> no MXU precision effects)
# ---------------------------------------------------------------------------
def _bilinear_upsample_ref(x_nchw, scale_factor):
    N, C, H, W = x_nchw.shape
    Ho, Wo = H * scale_factor, W * scale_factor

    def src(n_out, n_in):
        if n_out == 1:
            return jnp.zeros((n_out,), jnp.float32)
        return jnp.arange(n_out, dtype=jnp.float32) * (n_in - 1) / (n_out - 1)

    ys, xs = src(Ho, H), src(Wo, W)
    y0 = jnp.floor(ys).astype(jnp.int32)
    x0 = jnp.floor(xs).astype(jnp.int32)
    y1 = jnp.minimum(y0 + 1, H - 1)
    x1 = jnp.minimum(x0 + 1, W - 1)
    wy = (ys - y0.astype(jnp.float32))[None, None, :, None]
    wx = (xs - x0.astype(jnp.float32))[None, None, None, :]

    def gather(yi, xi):
        return x_nchw[:, :, yi, :][:, :, :, xi]

    top = gather(y0, x0) * (1.0 - wx) + gather(y0, x1) * wx
    bot = gather(y1, x0) * (1.0 - wx) + gather(y1, x1) * wx
    return top * (1.0 - wy) + bot * wy


def reference_forward(x_nchw, conv_w, conv_b, scale_factor=1):
    if scale_factor > 1:
        x_nchw = _bilinear_upsample_ref(x_nchw, scale_factor)
    C = x_nchw.shape[1]
    y = jnp.sum(x_nchw * conv_w.reshape(1, C, 1, 1), axis=1, keepdims=True) \
        + conv_b.reshape(1, 1, 1, 1)
    return jax.nn.sigmoid(y)


if __name__ == "__main__":
    key = jax.random.PRNGKey(0)
    k_x, k_w, k_b, k_x2, k_w2 = jax.random.split(key, 5)

    # --- small-C (VPU reduce) path, scale_factor = 1: exact f32 ---
    N, C, H, W = 2, 4, 16, 16
    x = jax.random.normal(k_x, (N, C, H, W), dtype=jnp.float32)
    conv_w = jax.random.normal(k_w, (1, C, 1, 1), dtype=jnp.float32) * 0.5
    conv_b = jax.random.normal(k_b, (1,), dtype=jnp.float32) * 0.1

    out1 = jax.block_until_ready(ig_forward(x, conv_w, conv_b, scale_factor=1))
    ref1 = reference_forward(x, conv_w, conv_b, scale_factor=1)
    assert out1.shape == (N, 1, H, W)
    assert jnp.allclose(out1, ref1, atol=1e-5, rtol=1e-5)

    # --- scale_factor = 2: conv commuted ahead of the fused upsample+sigmoid.
    # Looser tolerance: the upsample matmuls run on the MXU, whose f32 path
    # may internally use multi-pass bf16 accumulation.
    out2 = jax.block_until_ready(ig_forward(x, conv_w, conv_b, scale_factor=2))
    ref2 = reference_forward(x, conv_w, conv_b, scale_factor=2)
    assert out2.shape == (N, 1, 2 * H, 2 * W)
    assert jnp.allclose(out2, ref2, atol=1e-3, rtol=1e-3)

    # --- larger-C (MXU) conv path ---
    C2 = 64
    x2 = jax.random.normal(k_x2, (1, C2, 16, 16), dtype=jnp.float32)
    w2 = jax.random.normal(k_w2, (1, C2, 1, 1), dtype=jnp.float32) * 0.2
    out3 = jax.block_until_ready(ig_forward(x2, w2, conv_b, scale_factor=1))
    ref3 = reference_forward(x2, w2, conv_b, scale_factor=1)
    assert out3.shape == (1, 1, 16, 16)
    assert jnp.allclose(out3, ref3, atol=1e-3, rtol=1e-3)

    print("KERNEL_OK")
</pallas_src>

<mosaic_0001>
module attributes {stable_mosaic.version = 11 : i64} {
  func.func @_conv1x1_kernel(%arg0: i32, %arg1: i32, %arg2: memref<4x1xf32, #tpu.memory_space<vmem>>, %arg3: memref<1xf32, #tpu.memory_space<smem>>, %arg4: memref<1x4x128xf32, #tpu.memory_space<vmem>>, %arg5: memref<1x1x128xf32, #tpu.memory_space<vmem>>) attributes {dimension_semantics = [#tpu.dimension_semantics<parallel>, #tpu.dimension_semantics<parallel>], iteration_bounds = array<i64: 2, 2>, scalar_prefetch = 0 : i64, scratch_operands = 0 : i64, tpu.core_type = #tpu.core_type<tc>, window_params = [{pipeline_mode = #tpu.pipeline_mode<synchronous>, transform_indices = @transform_0, window_bounds = array<i64: 4, 1>}, {transform_indices = @transform_1, window_bounds = array<i64: 1>}, {transform_indices = @transform_2, window_bounds = array<i64: 1, 4, 128>}, {transform_indices = @transform_3, window_bounds = array<i64: 1, 1, 128>}]} {
    %c0 = arith.constant 0 : index
    %0 = memref.load %arg3[%c0] : memref<1xf32, #tpu.memory_space<smem>>
    %c0_0 = arith.constant 0 : index
    %c0_1 = arith.constant 0 : index
    %c0_2 = arith.constant 0 : index
    %1 = vector.load %arg4[%c0_0, %c0_1, %c0_2] : memref<1x4x128xf32, #tpu.memory_space<vmem>>, vector<1x4x128xf32>
    %2 = vector.shape_cast %1 : vector<1x4x128xf32> to vector<4x128xf32>
    %c0_3 = arith.constant 0 : index
    %c0_4 = arith.constant 0 : index
    %3 = vector.load %arg2[%c0_3, %c0_4] : memref<4x1xf32, #tpu.memory_space<vmem>>, vector<4x1xf32>
    %4 = vector.broadcast %3 : vector<4x1xf32> to vector<4x128xf32>
    %5 = arith.mulf %2, %4 : vector<4x128xf32>
    %cst = arith.constant dense<0.000000e+00> : vector<128xf32>
    %6 = vector.multi_reduction <add>, %5, %cst [0] : vector<4x128xf32> to vector<128xf32>
    %7 = vector.shape_cast %6 : vector<128xf32> to vector<1x128xf32>
    %8 = vector.broadcast %0 : f32 to vector<1x128xf32>
    %9 = arith.addf %7, %8 : vector<1x128xf32>
    %10 = arith.negf %9 : vector<1x128xf32>
    %11 = math.exp %10 : vector<1x128xf32>
    %cst_5 = arith.constant 1.000000e+00 : f32
    %12 = vector.broadcast %cst_5 : f32 to vector<1x128xf32>
    %13 = arith.addf %12, %11 : vector<1x128xf32>
    %14 = arith.divf %12, %13 : vector<1x128xf32>
    %c0_6 = arith.constant 0 : index
    %c0_7 = arith.constant 0 : index
    %c0_8 = arith.constant 0 : index
    %15 = vector.load %arg5[%c0_6, %c0_7, %c0_8] : memref<1x1x128xf32, #tpu.memory_space<vmem>>, vector<1x1x128xf32>
    %16 = vector.shape_cast %15 : vector<1x1x128xf32> to vector<1x128xf32>
    %17 = vector.shape_cast %14 : vector<1x128xf32> to vector<1x1x128xf32>
    tpu.vector_store %arg5[%c0_6, %c0_7, %c0_8], %17 {strides = array<i32>} : memref<1x1x128xf32, #tpu.memory_space<vmem>>, vector<1x1x128xf32>,
    return
  }
  func.func @transform_0(%arg0: i32, %arg1: i32) -> (i32, i32) {
    %c0_i32 = arith.constant 0 : i32
    %c0_i32_0 = arith.constant 0 : i32
    %c0_i32_1 = arith.constant 0 : i32
    return %c0_i32, %c0_i32_0 : i32, i32
  }
  func.func @transform_1(%arg0: i32, %arg1: i32) -> i32 {
    %c0_i32 = arith.constant 0 : i32
    %c0_i32_0 = arith.constant 0 : i32
    return %c0_i32 : i32
  }
  func.func @transform_2(%arg0: i32, %arg1: i32) -> (i32, i32, i32) {
    %c0_i32 = arith.constant 0 : i32
    %c0_i32_0 = arith.constant 0 : i32
    return %arg0, %c0_i32, %arg1 : i32, i32, i32
  }
  func.func @transform_3(%arg0: i32, %arg1: i32) -> (i32, i32, i32) {
    %c0_i32 = arith.constant 0 : i32
    %c0_i32_0 = arith.constant 0 : i32
    return %arg0, %c0_i32, %arg1 : i32, i32, i32
  }
}

</mosaic_0001>

<llo_original>
// kernel: tpu_custom_call.1
$region0: #{tpu_custom_call.1}
  #allocation0 [shape = 'u32[]', space=smem, size = 0x4, offset = 0x4, fixed_abs, tag = 'smem constant byte address 0x4 - core index']
  #allocation1 [shape = 'u32[144,128]{1,0:T(1,128)}', space=vmem, size = 0x12000, scoped, tag = 'internal scratch']
  #allocation2 [shape = 'f32[1]{0:T(128)S(6)}', space=smem, size = 0x200, scoped, tag = 'scoped memory for tpu_custom_call.1']
  %s0 = inlined_call_operand.vmem [shape: f32[4,1], index: 0, kind: input, shape index: {}]
  %s1 = inlined_call_operand.<no memory space> [shape: f32[1], index: 1, kind: input, shape index: {}]
  %s2 = inlined_call_operand.hbm [shape: f32[2,4,256], index: 2, kind: input, shape index: {}]
  %s3 = inlined_call_operand.hbm [shape: f32[2,1,256], index: 3, kind: output, shape index: {}]
  %s4 = sld [smem:[#allocation0]]
  $region49: #{tpu_custom_call.1} parent=0
    _
  %s6 = ssub.s32 1, %s4
  %s7 = scalar_select 0, %s6, %s4
  %8 = sst [smem:[#allocation2]] %s1
  $region1: #{tpu_custom_call.1} parent=0
    #allocation3 [shape = 'u8[4096]{0}', space=vmem, size = 0x1000, scoped, tag = 'input window, operand 2']
    #allocation4 [shape = 's32[2]{0}', space=sflag, size = 0x8, scoped, tag = 'scoped memory for tpu_custom_call.1']
    #allocation5 [shape = 's32[2]{0}', space=sflag, size = 0x8, scoped, tag = 'scoped memory for tpu_custom_call.1']
    #allocation6 [shape = 'u8[1024]{0}', space=vmem, size = 0x400, scoped, tag = 'output window, operand 0']
    %9 = vsyncpa [#allocation4], 0
    %s10 = scalar_lea.sflag [#allocation4], 1
    %11 = vsyncpa %s10, 0
    %12 = vsyncpa [#allocation5], 0
    %s13 = scalar_lea.sflag [#allocation5], 1
    %14 = vsyncpa %s13, 0
    loop: start=0, step=1, limit=6
    $region2: #{tpu_custom_call.1} parent=1 // loop_pre_header
      _
    $region3: #{tpu_custom_call.1} parent=1 // loop_header
      %s16 = sphi 0, %s20
      %p17 = scmp.ge.s32.totalorder %s16, 6
      %s23 = sphi 0, %s35
      %s24 = sphi 0, %s31
      %s25 = sphi 0, %s23
      %s26 = sphi 0, %s24
      %s27 = sphi 0, %s25
      %s28 = sphi 0, %s26
      %s36 = sphi 0, %s36
      %s38 = sphi 0, %s36
      %s39 = sphi 0, %s38
      %s53 = sphi 0, %s39
      %s57 = sphi 0, %s57
      %s59 = sphi 0, %s57
      %s60 = sphi 0, %s59
      %s74 = sphi 0, %s60
      %s82 = sphi 0, %s84
      %s85 = sphi 0, %s82
      %s86 = sphi 0, %s85
      %s102 = sphi 0, %s86
      %s110 = sphi 0, %s112
      %s113 = sphi 0, %s110
      %s114 = sphi 0, %s113
      %s130 = sphi 0, %s114
    $region4: #{tpu_custom_call.1} parent=1 // loop_header_branch
      %19 = sbr.rel (%p17) target = $region8
    $region5: #{tpu_custom_call.1} parent=1 // loop_body
      %s21 = ssub.s32 %s16, 1
      %s22 = ssub.s32 %s16, 2
      %s29 = sadd.s32 1, %s24
      %p30 = scmp.ge.s32.totalorder %s29, 2
      %s31 = scalar_select %p30, 0, %s29
      %s32 = sadd.s32 1, %s23
      %s33 = scalar_select %p30, %s32, %s23
      %p34 = scmp.ge.s32.totalorder %s33, 2
      %s35 = scalar_select %p34, 0, %s33
      %s37 = sadd.s32 %s36, 1
      %p40 = scmp.eq.s32.totalorder %s16, 3
      %p41 = scmp.ne.s32.totalorder %s36, %s38
      %p42 = scmp.eq.s32.totalorder %s16, 0
      %p43 = por %p41, %p42
      %p44 = scmp.ne.s32.totalorder %s36, %s38
      %p45 = scmp.eq.s32.totalorder %s21, 3
      %p46 = por %p44, %p45
      %p47 = scmp.ne.s32.totalorder %s38, %s39
      %p48 = scmp.eq.s32.totalorder %s21, 0
      %p49 = por %p47, %p48
      %p50 = scmp.ne.s32.totalorder %s38, %s39
      %p51 = scmp.eq.s32.totalorder %s22, 3
      %p52 = por %p50, %p51
      %p54 = scmp.ne.s32.totalorder %s39, %s53
      %p55 = scmp.eq.s32.totalorder %s22, 0
      %p56 = por %p54, %p55
      %s58 = sadd.s32 %s57, 1
      %p61 = scmp.eq.s32.totalorder %s16, 3
      %p62 = scmp.ne.s32.totalorder %s57, %s59
      %p63 = scmp.eq.s32.totalorder %s16, 0
      %p64 = por %p62, %p63
      %p65 = scmp.ne.s32.totalorder %s57, %s59
      %p66 = scmp.eq.s32.totalorder %s21, 3
      %p67 = por %p65, %p66
      %p68 = scmp.ne.s32.totalorder %s59, %s60
      %p69 = scmp.eq.s32.totalorder %s21, 0
      %p70 = por %p68, %p69
      %p71 = scmp.ne.s32.totalorder %s59, %s60
      %p72 = scmp.eq.s32.totalorder %s22, 3
      %p73 = por %p71, %p72
      %p75 = scmp.ne.s32.totalorder %s60, %s74
      %p76 = scmp.eq.s32.totalorder %s22, 0
      %p77 = por %p75, %p76
      %s78 = ssub.s32 %s23, %s35
      %s79 = ssub.s32 %s24, %s31
      %s80 = sor.u32 %s78, %s79
      %p81 = scmp.eq.s32.totalorder %s80, 0
      %s83 = sadd.s32 %s82, 1
      %s84 = scalar_select %p81, %s82, %s83
      %p87 = pneg %p81
      %p88 = scmp.eq.s32.totalorder %s16, 3
      %p89 = por %p87, %p88
      %p90 = scmp.ne.s32.totalorder %s82, %s85
      %p91 = scmp.eq.s32.totalorder %s16, 0
      %p92 = por %p90, %p91
      %p93 = scmp.ne.s32.totalorder %s82, %s85
      %p94 = scmp.eq.s32.totalorder %s21, 3
      %p95 = por %p93, %p94
      %p96 = scmp.ne.s32.totalorder %s85, %s86
      %p97 = scmp.eq.s32.totalorder %s21, 0
      %p98 = por %p96, %p97
      %p99 = scmp.ne.s32.totalorder %s85, %s86
      %p100 = scmp.eq.s32.totalorder %s22, 3
      %p101 = por %p99, %p100
      %p103 = scmp.ne.s32.totalorder %s86, %s102
      %p104 = scmp.eq.s32.totalorder %s22, 0
      %p105 = por %p103, %p104
      %s106 = ssub.s32 %s23, %s35
      %s107 = ssub.s32 %s24, %s31
      %s108 = sor.u32 %s106, %s107
      %p109 = scmp.eq.s32.totalorder %s108, 0
      %s111 = sadd.s32 %s110, 1
      %s112 = scalar_select %p109, %s110, %s111
      %p115 = pneg %p109
      %p116 = scmp.eq.s32.totalorder %s16, 3
      %p117 = por %p115, %p116
      %p118 = scmp.ne.s32.totalorder %s110, %s113
      %p119 = scmp.eq.s32.totalorder %s16, 0
      %p120 = por %p118, %p119
      %p121 = scmp.ne.s32.totalorder %s110, %s113
      %p122 = scmp.eq.s32.totalorder %s21, 3
      %p123 = por %p121, %p122
      %p124 = scmp.ne.s32.totalorder %s113, %s114
      %p125 = scmp.eq.s32.totalorder %s21, 0
      %p126 = por %p124, %p125
      %p127 = scmp.ne.s32.totalorder %s113, %s114
      %p128 = scmp.eq.s32.totalorder %s22, 3
      %p129 = por %p127, %p128
      %p131 = scmp.ne.s32.totalorder %s114, %s130
      %p132 = scmp.eq.s32.totalorder %s22, 0
      %p133 = por %p131, %p132
      %p134 = scmp.le.s32.totalorder 1, %s16
      %p135 = scmp.lt.s32.totalorder %s16, 5
      %p136 = pnand %p134, %p135
      %p137 = pneg %p136
      // Predicated region
      $region9: #{tpu_custom_call.1} parent=5 // pred_check
        _
      $region10: #{tpu_custom_call.1} parent=5 // pred_check_branch
        %139 = sbr.rel (%p136) target = $region12
      $region11: #{tpu_custom_call.1} parent=5 // pred_region
        %s140 = ssub.s32 %s16, 1
        // Predicated region
        $region13: #{tpu_custom_call.1} parent=11 // pred_check
          %p141 = pneg %p49
        $region14: #{tpu_custom_call.1} parent=11 // pred_check_branch
          %143 = sbr.rel (%p141) target = $region16
        $region15: #{tpu_custom_call.1} parent=11 // pred_region
          _
        $region16: #{tpu_custom_call.1} parent=11 // pred_fallthru
          _
        // Predicated region
        $region17: #{tpu_custom_call.1} parent=11 // pred_check
          %p144 = pneg %p70
        $region18: #{tpu_custom_call.1} parent=11 // pred_check_branch
          %146 = sbr.rel (%p144) target = $region20
        $region19: #{tpu_custom_call.1} parent=11 // pred_region
          _
        $region20: #{tpu_custom_call.1} parent=11 // pred_fallthru
          _
      $region12: #{tpu_custom_call.1} parent=5 // pred_fallthru
        _
      %p147 = scmp.lt.s32.totalorder %s16, 4
      // Predicated region
      $region21: #{tpu_custom_call.1} parent=5 // pred_check
        %p148 = pneg %p147
      $region22: #{tpu_custom_call.1} parent=5 // pred_check_branch
        %150 = sbr.rel (%p148) target = $region24
      $region23: #{tpu_custom_call.1} parent=5 // pred_region
        // Predicated region
        $region25: #{tpu_custom_call.1} parent=23 // pred_check
          %p151 = pneg %p92
        $region26: #{tpu_custom_call.1} parent=23 // pred_check_branch
          %153 = sbr.rel (%p151) target = $region28
        $region27: #{tpu_custom_call.1} parent=23 // pred_region
          %s154 = sand.u32 %s82, 1
          %s155 = scalar_lea.sflag [#allocation4], %s154
          %s156 = sand.u32 %s82, 1
          %s157 = smul.addr %s156, 4
          %s158 = scalar_lea.vmem [#allocation3], %s157
          %s160 = ssub.s32 64, 64
          %161 = vsyncadd %s155, %s160
          %s162 = smul.addr %s23, 2
          %s163 = sadd.s32 %s24, %s162
          %s164 = smul.addr %s163, 64
          %s165 = scalar_lea.hbm %s2, %s164
          %s167 = sshll.u32 %s158, 4
          %s168 = int_to_ptr.vmem [resolvable:$true] %s167
          %170 = dma.hbm_to_vmem [thread:$0]  %s165, 64, %s168, %s155
        $region28: #{tpu_custom_call.1} parent=23 // pred_fallthru
          _
      $region24: #{tpu_custom_call.1} parent=5 // pred_fallthru
        _
      %p171 = scmp.le.s32.totalorder 1, %s16
      %p172 = scmp.lt.s32.totalorder %s16, 5
      %p173 = pnand %p171, %p172
      %p174 = pneg %p173
      // Predicated region
      $region29: #{tpu_custom_call.1} parent=5 // pred_check
        _
      $region30: #{tpu_custom_call.1} parent=5 // pred_check_branch
        %176 = sbr.rel (%p173) target = $region32
      $region31: #{tpu_custom_call.1} parent=5 // pred_region
        %s177 = ssub.s32 %s16, 1
        %s178 = sand.u32 %s85, 1
        %s179 = scalar_lea.sflag [#allocation4], %s178
        %s180 = sand.u32 %s85, 1
        %s181 = smul.addr %s180, 4
        %s182 = scalar_lea.vmem [#allocation3], %s181
        // Predicated region
        $region33: #{tpu_custom_call.1} parent=31 // pred_check
          %p183 = pneg %p98
        $region34: #{tpu_custom_call.1} parent=31 // pred_check_branch
          %185 = sbr.rel (%p183) target = $region36
        $region35: #{tpu_custom_call.1} parent=31 // pred_region
          %186 = dma.done %s179, 64
        $region36: #{tpu_custom_call.1} parent=31 // pred_fallthru
          _
        %p187 = pneg %p49
        %p188 = pneg %p46
        %p189 = pneg %p70
        %p190 = pneg %p67
        %s191 = sand.u32 %s85, 1
        %s192 = scalar_lea.sflag [#allocation4], %s191
        %s193 = sand.u32 %s85, 1
        %s194 = smul.addr %s193, 4
        %s195 = scalar_lea.vmem [#allocation3], %s194
        %p196 = pneg %p98
        %p197 = pneg %p95
        %p198 = pneg %p126
        %p199 = pneg %p123
        %s200 = sand.u32 %s113, 1
        %s201 = scalar_lea.sflag [#allocation5], %s200
        %s202 = sand.u32 %s113, 1
        %s203 = scalar_lea.vmem [#allocation6], %s202
        %s204 = sld [smem:[#allocation2]]
        %v205 = vld [vmem:[%s182] sm:$0xf]
        %v206 = vld [vmem:[%s0] sm:$0xf]
        %208 = vset.pattern.permute.xlu0 0
        %209 = vperm.xlu0 %208, %v206
        %v210 = vpop.permute.xlu0 %209
        %v212 = vmul.f32 %v205, %v210
        %vm213 = vcmask 1043456
        %v214 = vsel %vm213, %v212, 0.0
        %v215 = vrot.slane %v214, 4
        %v216 = vadd.f32 %v214, %v215
        %v217 = vrot.slane %v216, 2
        %v218 = vadd.f32 %v216, %v217
        %v219 = vrot.slane %v218, 1
        %v220 = vadd.f32 %v218, %v219
        %v221 = vstv %s204
        %v222 = vadd.f32 %v220, %v221
        %v223 = vxor.u32 %v222, 2147483648
        %v224 = vmul.f32 %v223, 1.442695
        %v225 = vpow.pop %v224
        %v226 = vadd.f32 %v225, 1.0
        %v227 = vrcp.pop %v226
        %v228 = vmul.f32 1.0, %v227
        %229 = vst [vmem:[%s203] sm:$0x1] %v228
        %s230 = sand.u32 %s113, 1
        %s231 = scalar_lea.sflag [#allocation5], %s230
        %s232 = sand.u32 %s113, 1
        %s233 = scalar_lea.vmem [#allocation6], %s232
        // Predicated region
        $region37: #{tpu_custom_call.1} parent=31 // pred_check
          %p234 = pneg %p123
        $region38: #{tpu_custom_call.1} parent=31 // pred_check_branch
          %236 = sbr.rel (%p234) target = $region40
        $region39: #{tpu_custom_call.1} parent=31 // pred_region
          %s238 = ssub.s32 16, 16
          %239 = vsyncadd %s231, %s238
          %s240 = smul.addr %s25, 2
          %s241 = sadd.s32 %s26, %s240
          %s242 = smul.addr %s241, 16
          %s243 = scalar_lea.hbm %s3, %s242
          %s245 = sshll.u32 %s233, 4
          %s246 = int_to_ptr.vmem [resolvable:$true] %s245
          %248 = dma.vmem_to_hbm [thread:$0]  %s246, 16, %s243, %s231
        $region40: #{tpu_custom_call.1} parent=31 // pred_fallthru
          _
      $region32: #{tpu_custom_call.1} parent=5 // pred_fallthru
        _
      %p249 = scmp.le.s32.totalorder 2, %s16
      // Predicated region
      $region41: #{tpu_custom_call.1} parent=5 // pred_check
        %p250 = pneg %p249
      $region42: #{tpu_custom_call.1} parent=5 // pred_check_branch
        %252 = sbr.rel (%p250) target = $region44
      $region43: #{tpu_custom_call.1} parent=5 // pred_region
        %s253 = ssub.s32 %s16, 2
        // Predicated region
        $region45: #{tpu_custom_call.1} parent=43 // pred_check
          %p254 = pneg %p129
        $region46: #{tpu_custom_call.1} parent=43 // pred_check_branch
          %256 = sbr.rel (%p254) target = $region48
        $region47: #{tpu_custom_call.1} parent=43 // pred_region
          %s257 = sand.u32 %s114, 1
          %s258 = scalar_lea.sflag [#allocation5], %s257
          %s259 = sand.u32 %s114, 1
          %s260 = scalar_lea.vmem [#allocation6], %s259
          %261 = dma.done %s258, 16
        $region48: #{tpu_custom_call.1} parent=43 // pred_fallthru
          _
      $region44: #{tpu_custom_call.1} parent=5 // pred_fallthru
        _
    $region6: #{tpu_custom_call.1} parent=1 // loop_footer
      %s20 = sadd.s32 1, %s16
    $region7: #{tpu_custom_call.1} parent=1 // loop_footer_branch
      %15 = sbr.rel target = $region3
    $region8: #{tpu_custom_call.1} parent=1 // loop_exit
      _
    %262 = vsyncpa [#allocation4], 1
    %s263 = scalar_lea.sflag [#allocation4], 1
    %264 = vsyncpa %s263, 1
    %265 = vsyncpa [#allocation5], 1
    %s266 = scalar_lea.sflag [#allocation5], 1
    %267 = vsyncpa %s266, 1

</llo_original>
